<compile_context>
chip_gen: v7x
topology: tpu7x:2x2x1
jax: 0.10.0
libtpu: 0.0.40
codegen_flags: <defaults>
</compile_context>

<pallas_src>
import jax
import jax.numpy as jnp
from jax.experimental import pallas as pl
from jax.experimental.pallas import tpu as pltpu


_LANE = 128
_SUBLANE = 8
_VMEM_LIMIT = 64 * 1024 * 1024


def _round_up(x, m):
    return ((x + m - 1) // m) * m


def _reduction_tiling(n, max_tile=512):
    """Pad the contraction dim to a lane-aligned size and pick a tile that divides it."""
    if n <= max_tile:
        n_pad = _round_up(n, _LANE)
        return n_pad, n_pad
    n_pad = _round_up(n, max_tile)
    return n_pad, max_tile


def _parallel_tiling(m, max_tile=512):
    """Pad a parallel (row) dim; pick a tile giving >=2 blocks when possible (megacore)."""
    if m <= 2 * _SUBLANE:
        t = _round_up(m, _SUBLANE)
        return t, t
    if m <= 2 * max_tile:
        t = _round_up((m + 1) // 2, _SUBLANE)
        return _round_up(m, t), t
    return _round_up(m, max_tile), max_tile


def _row_tile_for(n_pad, max_tile=512):
    """Row tile that divides n_pad (n_pad is a multiple of 128, and of 512 when > 512)."""
    if n_pad <= max_tile:
        return n_pad // 2 if n_pad >= 128 else n_pad
    return max_tile


# ----------------------------------------------------------------------------
# Kernel 1 (single-kernel path): fused one-hot + beta matmul, row-tiled K_inv
#   beta[rows, :] += K_inv[rows, kslice] @ onehot(y[kslice])   -> beta: [n_pad, 128]
# ----------------------------------------------------------------------------
def _beta_kernel(y_ref, kinv_ref, beta_ref):
    k = pl.program_id(1)

    @pl.when(k == 0)
    def _():
        beta_ref[...] = jnp.zeros_like(beta_ref)

    tk = y_ref.shape[0]
    c_pad = beta_ref.shape[1]
    cls = jax.lax.broadcasted_iota(jnp.int32, (tk, c_pad), 1)
    onehot = (y_ref[...] == cls).astype(jnp.float32)            # (tk, c_pad)
    beta_ref[...] += jnp.dot(kinv_ref[...], onehot,
                             preferred_element_type=jnp.float32)


def onehot_beta_pallas(y_i32, k_inv, n_class):
    n = k_inv.shape[0]
    c_pad = _round_up(max(int(n_class), 1), _LANE)
    n_pad, tk = _reduction_tiling(n)
    tm = _row_tile_for(n_pad)

    y_col = jnp.full((n_pad, 1), -1, dtype=jnp.int32).at[:n, 0].set(y_i32)
    kinv_p = jnp.zeros((n_pad, n_pad), jnp.float32).at[:n, :n].set(k_inv)

    beta = pl.pallas_call(
        _beta_kernel,
        out_shape=jax.ShapeDtypeStruct((n_pad, c_pad), jnp.float32),
        grid_spec=pltpu.PrefetchScalarGridSpec(
            num_scalar_prefetch=0,
            grid=(n_pad // tm, n_pad // tk),
            in_specs=[pl.BlockSpec((tk, 1), lambda i, k: (k, 0)),
                      pl.BlockSpec((tm, tk), lambda i, k: (i, k))],
            out_specs=pl.BlockSpec((tm, c_pad), lambda i, k: (i, 0)),
        ),
        compiler_params=pltpu.CompilerParams(
            dimension_semantics=("parallel", "arbitrary"),
            vmem_limit_bytes=_VMEM_LIMIT),
    )(y_col, kinv_p)
    return beta, n_pad, c_pad


# ----------------------------------------------------------------------------
# Kernel 2 (single-kernel path): y_pred = k_test @ beta, beta VMEM-resident
# ----------------------------------------------------------------------------
def _pred_resident_kernel(a_ref, b_ref, o_ref):
    k = pl.program_id(1)

    @pl.when(k == 0)
    def _():
        o_ref[...] = jnp.zeros_like(o_ref)

    tk = a_ref.shape[1]
    start = pl.multiple_of(k * tk, tk)
    o_ref[...] += jnp.dot(a_ref[...], b_ref[pl.ds(start, tk), :],
                          preferred_element_type=jnp.float32)


def _pred_tiled_kernel(a_ref, b_ref, o_ref):
    k = pl.program_id(1)

    @pl.when(k == 0)
    def _():
        o_ref[...] = jnp.zeros_like(o_ref)

    o_ref[...] += jnp.dot(a_ref[...], b_ref[...],
                          preferred_element_type=jnp.float32)


def pred_matmul_pallas(k_test, beta_pad, n_pad, c_pad):
    m, n = k_test.shape
    n_pad2, tk = _reduction_tiling(n)
    assert n_pad2 == n_pad
    m_pad, tm = _parallel_tiling(m)

    a = jnp.zeros((m_pad, n_pad), jnp.float32).at[:m, :n].set(k_test)

    # Keep beta fully resident in VMEM (constant block index -> single DMA) when small;
    # otherwise stream lane-dense (tk, c_pad) tiles.
    if n_pad * c_pad * 4 <= 8 * 1024 * 1024:
        b_spec = pl.BlockSpec((n_pad, c_pad), lambda i, k: (0, 0))
        kernel = _pred_resident_kernel
    else:
        b_spec = pl.BlockSpec((tk, c_pad), lambda i, k: (k, 0))
        kernel = _pred_tiled_kernel

    out = pl.pallas_call(
        kernel,
        out_shape=jax.ShapeDtypeStruct((m_pad, c_pad), jnp.float32),
        grid_spec=pltpu.PrefetchScalarGridSpec(
            num_scalar_prefetch=0,
            grid=(m_pad // tm, n_pad // tk),
            in_specs=[pl.BlockSpec((tm, tk), lambda i, k: (i, k)),
                      b_spec],
            out_specs=pl.BlockSpec((tm, c_pad), lambda i, k: (i, 0)),
        ),
        compiler_params=pltpu.CompilerParams(
            dimension_semantics=("parallel", "arbitrary"),
            vmem_limit_bytes=_VMEM_LIMIT),
    )(a, beta_pad)
    return out[:m]


# ----------------------------------------------------------------------------
# Multi-kernel path (one Gram matrix per class), batched over a class grid axis
# ----------------------------------------------------------------------------
def _beta_mc_kernel(y_ref, kinv_ref, beta_ref):
    # beta[c, rows, 0] += K_inv[c, rows, kslice] @ (y[kslice] == c)
    c = pl.program_id(0)
    k = pl.program_id(2)

    @pl.when(k == 0)
    def _():
        beta_ref[...] = jnp.zeros_like(beta_ref)

    onehot = (y_ref[...] == c).astype(jnp.float32)              # (tk, 1)
    beta_ref[...] += jnp.dot(kinv_ref[0], onehot,
                             preferred_element_type=jnp.float32)[None]


def _pred_mc_kernel(a_ref, b_ref, o_ref):
    # pred[c, rows, 0] += k_test[c, rows, kslice] @ beta[c, kslice, 0]
    k = pl.program_id(2)

    @pl.when(k == 0)
    def _():
        o_ref[...] = jnp.zeros_like(o_ref)

    o_ref[...] += jnp.dot(a_ref[0], b_ref[0],
                          preferred_element_type=jnp.float32)[None]


def beta_multiclass_pallas(y_i32, k_inv_all):
    c_num, n, _ = k_inv_all.shape
    n_pad, tk = _reduction_tiling(n)
    tr = _row_tile_for(n_pad)

    y_col = jnp.full((n_pad, 1), -1, dtype=jnp.int32).at[:n, 0].set(y_i32)
    kinv_p = jnp.zeros((c_num, n_pad, n_pad), jnp.float32).at[:, :n, :n].set(k_inv_all)

    beta = pl.pallas_call(
        _beta_mc_kernel,
        out_shape=jax.ShapeDtypeStruct((c_num, n_pad, 1), jnp.float32),
        grid_spec=pltpu.PrefetchScalarGridSpec(
            num_scalar_prefetch=0,
            grid=(c_num, n_pad // tr, n_pad // tk),
            in_specs=[pl.BlockSpec((tk, 1), lambda c, j, k: (k, 0)),
                      pl.BlockSpec((1, tr, tk), lambda c, j, k: (c, j, k))],
            out_specs=pl.BlockSpec((1, tr, 1), lambda c, j, k: (c, j, 0)),
        ),
        compiler_params=pltpu.CompilerParams(
            dimension_semantics=("parallel", "parallel", "arbitrary"),
            vmem_limit_bytes=_VMEM_LIMIT),
    )(y_col, kinv_p)
    return beta, n_pad


def pred_multiclass_pallas(k_test_all, beta_pad, n_pad):
    c_num, m, n = k_test_all.shape
    n_pad2, tk = _reduction_tiling(n)
    assert n_pad2 == n_pad
    m_pad, tm = _parallel_tiling(m)

    a = jnp.zeros((c_num, m_pad, n_pad), jnp.float32).at[:, :m, :n].set(k_test_all)

    pred = pl.pallas_call(
        _pred_mc_kernel,
        out_shape=jax.ShapeDtypeStruct((c_num, m_pad, 1), jnp.float32),
        grid_spec=pltpu.PrefetchScalarGridSpec(
            num_scalar_prefetch=0,
            grid=(c_num, m_pad // tm, n_pad // tk),
            in_specs=[pl.BlockSpec((1, tm, tk), lambda c, i, k: (c, i, k)),
                      pl.BlockSpec((1, tk, 1), lambda c, i, k: (c, k, 0))],
            out_specs=pl.BlockSpec((1, tm, 1), lambda c, i, k: (c, i, 0)),
        ),
        compiler_params=pltpu.CompilerParams(
            dimension_semantics=("parallel", "parallel", "arbitrary"),
            vmem_limit_bytes=_VMEM_LIMIT),
    )(a, beta_pad)
    return jnp.transpose(pred[:, :m, 0])                        # [m, C]


# ----------------------------------------------------------------------------
# Module equivalent
# ----------------------------------------------------------------------------
class ShapleyNTKRegressionPallas:
    def __init__(self, k_train, y, n_class, pre_inv=None):
        if pre_inv is not None:
            # TODO(synk): block-matrix inverse update (pre_inv) path not implemented.
            raise NotImplementedError("pre_inv path is not implemented")
        k_train = jnp.asarray(k_train, jnp.float32)
        n = k_train.shape[1]
        reg = 1e-6
        identity = jnp.eye(n, dtype=jnp.float32)[None]
        self.k_train = k_train + identity * reg
        self.y = jnp.asarray(y, jnp.int32)
        self.n_class = int(n_class)
        self.single_kernel = (k_train.shape[0] == 1)

    def forward(self, k_test, return_inv=False):
        k_test = jnp.asarray(k_test, jnp.float32)
        if self.single_kernel:
            # TODO(synk): explicit inverse stands in for torch.linalg.solve (no Pallas LU).
            k_inv = jnp.linalg.inv(self.k_train[0])
            beta_pad, n_pad, _ = onehot_beta_pallas(self.y, k_inv, self.n_class)
            pred_pad = pred_matmul_pallas(k_test[0], beta_pad, n_pad, beta_pad.shape[1])
            y_pred = pred_pad[:, :self.n_class]
            last_inv = k_inv
        else:
            k_train_c = self.k_train[:self.n_class]
            k_test_c = k_test[:self.n_class]
            k_inv_all = jnp.linalg.inv(k_train_c)               # batched over classes (XLA)
            beta_pad, n_pad = beta_multiclass_pallas(self.y, k_inv_all)
            y_pred = pred_multiclass_pallas(k_test_c, beta_pad, n_pad)
            last_inv = k_inv_all[self.n_class - 1]
        if return_inv:
            return y_pred, last_inv
        return y_pred


# ----------------------------------------------------------------------------
# Pure-JAX reference of the same forward pass
# ----------------------------------------------------------------------------
def _reference_forward(k_train, y, n_class, k_test):
    n = k_train.shape[1]
    k_reg = k_train.astype(jnp.float32) + jnp.eye(n, dtype=jnp.float32)[None] * 1e-6
    k_inv = jnp.linalg.inv(k_reg)
    onehot = (y[:, None] == jnp.arange(n_class)[None, :]).astype(jnp.float32)
    single = k_train.shape[0] == 1
    preds = []
    for i in range(n_class):
        kinv_i = k_inv[0] if single else k_inv[i]
        kt = k_test[0] if single else k_test[i]
        beta_i = kinv_i @ onehot[:, i]
        preds.append(kt.astype(jnp.float32) @ beta_i)
    return jnp.stack(preds, axis=1)


# ----------------------------------------------------------------------------
# Demo / self-check
# ----------------------------------------------------------------------------
if __name__ == "__main__":
    key = jax.random.PRNGKey(0)
    k1, k2, k3 = jax.random.split(key, 3)

    n, m, d, n_class = 200, 96, 32, 3   # deliberately non-multiples of 128 (padding path)

    X_train = jax.random.normal(k1, (n, d), dtype=jnp.float32)
    X_test = jax.random.normal(k2, (m, d), dtype=jnp.float32)
    y = jax.random.randint(k3, (n,), 0, n_class)

    gram = X_train @ X_train.T / d + 0.1 * jnp.eye(n, dtype=jnp.float32)
    gram_test = X_test @ X_train.T / d

    # ---- single-kernel path (k_train leading dim == 1) ----
    k_train_s = gram[None]                          # [1, n, n]
    k_test_s = gram_test[None]                      # [1, m, n]
    model_s = ShapleyNTKRegressionPallas(k_train_s, y, n_class)
    y_pred_s = jax.block_until_ready(model_s.forward(k_test_s))
    ref_s = _reference_forward(k_train_s, y, n_class, k_test_s)
    assert y_pred_s.shape == (m, n_class), y_pred_s.shape
    err_s = float(jnp.max(jnp.abs(y_pred_s - ref_s)))
    assert jnp.allclose(y_pred_s, ref_s, atol=2e-3, rtol=2e-3), err_s

    # ---- multi-kernel path (one Gram matrix per class) ----
    scales = jnp.asarray([1.0, 1.3, 0.7], dtype=jnp.float32)[:, None, None]
    k_train_m = gram[None] * scales                 # [C, n, n]
    k_test_m = gram_test[None] * scales             # [C, m, n]
    model_m = ShapleyNTKRegressionPallas(k_train_m, y, n_class)
    y_pred_m = jax.block_until_ready(model_m.forward(k_test_m))
    ref_m = _reference_forward(k_train_m, y, n_class, k_test_m)
    assert y_pred_m.shape == (m, n_class), y_pred_m.shape
    err_m = float(jnp.max(jnp.abs(y_pred_m - ref_m)))
    assert jnp.allclose(y_pred_m, ref_m, atol=2e-3, rtol=2e-3), err_m

    print("KERNEL_OK")
</pallas_src>

<mosaic_0001>
module attributes {stable_mosaic.version = 11 : i64} {
  func.func @_beta_kernel(%arg0: i32, %arg1: i32, %arg2: memref<256x1xi32, #tpu.memory_space<vmem>>, %arg3: memref<128x256xf32, #tpu.memory_space<vmem>>, %arg4: memref<128x128xf32, #tpu.memory_space<vmem>>) attributes {dimension_semantics = [#tpu.dimension_semantics<parallel>, #tpu.dimension_semantics<arbitrary>], iteration_bounds = array<i64: 2, 1>, scalar_prefetch = 0 : i64, scratch_operands = 0 : i64, tpu.core_type = #tpu.core_type<tc>, window_params = [{transform_indices = @transform_0, window_bounds = array<i64: 256, 1>}, {transform_indices = @transform_1, window_bounds = array<i64: 128, 256>}, {transform_indices = @transform_2, window_bounds = array<i64: 128, 128>}]} {
    %c0_i32 = arith.constant 0 : i32
    %0 = arith.cmpi eq, %arg1, %c0_i32 : i32
    %1 = arith.extui %0 : i1 to i32
    %c0_i32_0 = arith.constant 0 : i32
    %2 = arith.cmpi ne, %1, %c0_i32_0 : i32
    scf.if %2 {
      %cst_8 = arith.constant 0.000000e+00 : f32
      %14 = vector.broadcast %cst_8 : f32 to vector<128x128xf32>
      %c0_9 = arith.constant 0 : index
      %c0_10 = arith.constant 0 : index
      %15 = vector.load %arg4[%c0_9, %c0_10] : memref<128x128xf32, #tpu.memory_space<vmem>>, vector<128x128xf32>
      tpu.vector_store %arg4[%c0_9, %c0_10], %14 {strides = array<i32>} : memref<128x128xf32, #tpu.memory_space<vmem>>, vector<128x128xf32>,
    } else {
    }
    %3 = tpu.iota {dimensions = array<i32: 1>} : vector<256x128xi32>
    %c0 = arith.constant 0 : index
    %c0_1 = arith.constant 0 : index
    %4 = vector.load %arg2[%c0, %c0_1] : memref<256x1xi32, #tpu.memory_space<vmem>>, vector<256x1xi32>
    %5 = vector.broadcast %4 : vector<256x1xi32> to vector<256x128xi32>
    %6 = arith.cmpi eq, %5, %3 : vector<256x128xi32>
    %7 = arith.extui %6 : vector<256x128xi1> to vector<256x128xi32>
    %8 = arith.sitofp %7 : vector<256x128xi32> to vector<256x128xf32>
    %c0_2 = arith.constant 0 : index
    %c0_3 = arith.constant 0 : index
    %9 = vector.load %arg4[%c0_2, %c0_3] : memref<128x128xf32, #tpu.memory_space<vmem>>, vector<128x128xf32>
    %c0_4 = arith.constant 0 : index
    %c0_5 = arith.constant 0 : index
    %10 = vector.load %arg3[%c0_4, %c0_5] : memref<128x256xf32, #tpu.memory_space<vmem>>, vector<128x256xf32>
    %cst = arith.constant dense<0.000000e+00> : vector<128x128xf32>
    %11 = tpu.matmul %10, %8, %cst {dimension_numbers = #tpu.dot_dimension_numbers<[1], [0], [0], [1], [0, 0, 1, 1], [], []>} : vector<128x256xf32>, vector<256x128xf32>, vector<128x128xf32> -> vector<128x128xf32>
    %12 = arith.addf %9, %11 : vector<128x128xf32>
    %c0_6 = arith.constant 0 : index
    %c0_7 = arith.constant 0 : index
    %13 = vector.load %arg4[%c0_6, %c0_7] : memref<128x128xf32, #tpu.memory_space<vmem>>, vector<128x128xf32>
    tpu.vector_store %arg4[%c0_6, %c0_7], %12 {strides = array<i32>} : memref<128x128xf32, #tpu.memory_space<vmem>>, vector<128x128xf32>,
    return
  }
  func.func @transform_0(%arg0: i32, %arg1: i32) -> (i32, i32) {
    %c0_i32 = arith.constant 0 : i32
    %c0_i32_0 = arith.constant 0 : i32
    return %arg1, %c0_i32 : i32, i32
  }
  func.func @transform_1(%arg0: i32, %arg1: i32) -> (i32, i32) {
    %c0_i32 = arith.constant 0 : i32
    return %arg0, %arg1 : i32, i32
  }
  func.func @transform_2(%arg0: i32, %arg1: i32) -> (i32, i32) {
    %c0_i32 = arith.constant 0 : i32
    %c0_i32_0 = arith.constant 0 : i32
    return %arg0, %c0_i32 : i32, i32
  }
}

</mosaic_0001>

<llo_original>
// kernel: tpu_custom_call.1
$region0: #{tpu_custom_call.1}
  #allocation0 [shape = 'u32[]', space=smem, size = 0x4, offset = 0x4, fixed_abs, tag = 'smem constant byte address 0x4 - core index']
  #allocation1 [shape = 'u32[144,128]{1,0:T(1,128)}', space=vmem, size = 0x12000, scoped, tag = 'internal scratch']
  %s0 = inlined_call_operand.hbm [shape: s32[256,1], index: 0, kind: input, shape index: {}]
  %s1 = inlined_call_operand.hbm [shape: f32[256,256], index: 1, kind: input, shape index: {}]
  %s2 = inlined_call_operand.hbm [shape: f32[256,128], index: 2, kind: output, shape index: {}]
  %s3 = sld [smem:[#allocation0]]
  $region53: #{tpu_custom_call.1} parent=0
    _
  %s5 = ssub.s32 1, %s3
  %s6 = scalar_select 0, %s5, %s3
  $region1: #{tpu_custom_call.1} parent=0
    #allocation2 [shape = 'u8[131072]{0}', space=vmem, size = 0x20000, scoped, tag = 'input window, operand 0, single buffered']
    #allocation3 [shape = 's32[2]{0}', space=sflag, size = 0x8, scoped, tag = 'scoped memory for tpu_custom_call.1']
    #allocation4 [shape = 's32[2]{0}', space=sflag, size = 0x8, scoped, tag = 'scoped memory for tpu_custom_call.1']
    #allocation5 [shape = 'u8[262144]{0}', space=vmem, size = 0x40000, scoped, tag = 'input window, operand 1']
    #allocation6 [shape = 's32[2]{0}', space=sflag, size = 0x8, scoped, tag = 'scoped memory for tpu_custom_call.1']
    #allocation7 [shape = 'u8[131072]{0}', space=vmem, size = 0x20000, scoped, tag = 'output window, operand 0']
    %7 = vsyncpa [#allocation3], 0
    %8 = vsyncpa [#allocation6], 0
    %s9 = scalar_lea.sflag [#allocation6], 1
    %10 = vsyncpa %s9, 0
    %11 = vsyncpa [#allocation4], 0
    %s12 = scalar_lea.sflag [#allocation4], 1
    %13 = vsyncpa %s12, 0
    loop: start=0, step=1, limit=4
    $region2: #{tpu_custom_call.1} parent=1 // loop_pre_header
      _
    $region3: #{tpu_custom_call.1} parent=1 // loop_header
      %s15 = sphi 0, %s19
      %p16 = scmp.ge.s32.totalorder %s15, 4
      %s22 = sphi 0, %s34
      %s23 = sphi 0, %s30
      %s24 = sphi 0, %s22
      %s25 = sphi 0, %s23
      %s26 = sphi 0, %s24
      %s27 = sphi 0, %s25
      %s37 = sphi 0, %s39
      %s40 = sphi 0, %s37
      %s41 = sphi 0, %s40
      %s57 = sphi 0, %s41
      %s65 = sphi 0, %s67
      %s68 = sphi 0, %s65
      %s69 = sphi 0, %s68
      %s85 = sphi 0, %s69
      %s91 = sphi 0, %s93
      %s94 = sphi 0, %s91
      %s95 = sphi 0, %s94
      %s111 = sphi 0, %s95
    $region4: #{tpu_custom_call.1} parent=1 // loop_header_branch
      %18 = sbr.rel (%p16) target = $region8
    $region5: #{tpu_custom_call.1} parent=1 // loop_body
      %s20 = ssub.s32 %s15, 1
      %s21 = ssub.s32 %s15, 2
      %s28 = sadd.s32 1, %s23
      %p29 = scmp.ge.s32.totalorder %s28, 1
      %s30 = scalar_select %p29, 0, %s28
      %s31 = sadd.s32 1, %s22
      %s32 = scalar_select %p29, %s31, %s22
      %p33 = scmp.ge.s32.totalorder %s32, 2
      %s34 = scalar_select %p33, 0, %s32
      %s35 = ssub.s32 %s23, %s30
      %p36 = scmp.eq.s32.totalorder %s35, 0
      %s38 = sadd.s32 %s37, 1
      %s39 = scalar_select %p36, %s37, %s38
      %p42 = pneg %p36
      %p43 = scmp.eq.s32.totalorder %s15, 1
      %p44 = por %p42, %p43
      %p45 = scmp.ne.s32.totalorder %s37, %s40
      %p46 = scmp.eq.s32.totalorder %s15, 0
      %p47 = por %p45, %p46
      %p48 = scmp.ne.s32.totalorder %s37, %s40
      %p49 = scmp.eq.s32.totalorder %s20, 1
      %p50 = por %p48, %p49
      %p51 = scmp.ne.s32.totalorder %s40, %s41
      %p52 = scmp.eq.s32.totalorder %s20, 0
      %p53 = por %p51, %p52
      %p54 = scmp.ne.s32.totalorder %s40, %s41
      %p55 = scmp.eq.s32.totalorder %s21, 1
      %p56 = por %p54, %p55
      %p58 = scmp.ne.s32.totalorder %s41, %s57
      %p59 = scmp.eq.s32.totalorder %s21, 0
      %p60 = por %p58, %p59
      %s61 = ssub.s32 %s22, %s34
      %s62 = ssub.s32 %s23, %s30
      %s63 = sor.u32 %s61, %s62
      %p64 = scmp.eq.s32.totalorder %s63, 0
      %s66 = sadd.s32 %s65, 1
      %s67 = scalar_select %p64, %s65, %s66
      %p70 = pneg %p64
      %p71 = scmp.eq.s32.totalorder %s15, 1
      %p72 = por %p70, %p71
      %p73 = scmp.ne.s32.totalorder %s65, %s68
      %p74 = scmp.eq.s32.totalorder %s15, 0
      %p75 = por %p73, %p74
      %p76 = scmp.ne.s32.totalorder %s65, %s68
      %p77 = scmp.eq.s32.totalorder %s20, 1
      %p78 = por %p76, %p77
      %p79 = scmp.ne.s32.totalorder %s68, %s69
      %p80 = scmp.eq.s32.totalorder %s20, 0
      %p81 = por %p79, %p80
      %p82 = scmp.ne.s32.totalorder %s68, %s69
      %p83 = scmp.eq.s32.totalorder %s21, 1
      %p84 = por %p82, %p83
      %p86 = scmp.ne.s32.totalorder %s69, %s85
      %p87 = scmp.eq.s32.totalorder %s21, 0
      %p88 = por %p86, %p87
      %s89 = ssub.s32 %s22, %s34
      %p90 = scmp.eq.s32.totalorder %s89, 0
      %s92 = sadd.s32 %s91, 1
      %s93 = scalar_select %p90, %s91, %s92
      %p96 = pneg %p90
      %p97 = scmp.eq.s32.totalorder %s15, 1
      %p98 = por %p96, %p97
      %p99 = scmp.ne.s32.totalorder %s91, %s94
      %p100 = scmp.eq.s32.totalorder %s15, 0
      %p101 = por %p99, %p100
      %p102 = scmp.ne.s32.totalorder %s91, %s94
      %p103 = scmp.eq.s32.totalorder %s20, 1
      %p104 = por %p102, %p103
      %p105 = scmp.ne.s32.totalorder %s94, %s95
      %p106 = scmp.eq.s32.totalorder %s20, 0
      %p107 = por %p105, %p106
      %p108 = scmp.ne.s32.totalorder %s94, %s95
      %p109 = scmp.eq.s32.totalorder %s21, 1
      %p110 = por %p108, %p109
      %p112 = scmp.ne.s32.totalorder %s95, %s111
      %p113 = scmp.eq.s32.totalorder %s21, 0
      %p114 = por %p112, %p113
      %p115 = scmp.le.s32.totalorder 1, %s15
      %p116 = scmp.lt.s32.totalorder %s15, 3
      %p117 = pnand %p115, %p116
      %p118 = pneg %p117
      // Predicated region
      $region9: #{tpu_custom_call.1} parent=5 // pred_check
        _
      $region10: #{tpu_custom_call.1} parent=5 // pred_check_branch
        %120 = sbr.rel (%p117) target = $region12
      $region11: #{tpu_custom_call.1} parent=5 // pred_region
        %s121 = ssub.s32 %s15, 1
        // Predicated region
        $region13: #{tpu_custom_call.1} parent=11 // pred_check
          %p122 = pneg %p53
        $region14: #{tpu_custom_call.1} parent=11 // pred_check_branch
          %124 = sbr.rel (%p122) target = $region16
        $region15: #{tpu_custom_call.1} parent=11 // pred_region
          %s125 = smul.u32 32, %s25
          %s127 = ssub.s32 4096, 4096
          %128 = vsyncadd [#allocation3], %s127
          %s129 = smul.addr %s125, 128
          %s130 = scalar_lea.hbm %s0, %s129
          %s131 = sshll.u32 [#allocation2], 4
          %s132 = int_to_ptr.vmem [resolvable:$true] %s131
          %137 = dma.hbm_to_vmem [thread:$0]  %s130, 4096, %s132, [#allocation3], 128, 128, 8
        $region16: #{tpu_custom_call.1} parent=11 // pred_fallthru
          _
      $region12: #{tpu_custom_call.1} parent=5 // pred_fallthru
        _
      %p138 = scmp.lt.s32.totalorder %s15, 2
      // Predicated region
      $region17: #{tpu_custom_call.1} parent=5 // pred_check
        %p139 = pneg %p138
      $region18: #{tpu_custom_call.1} parent=5 // pred_check_branch
        %141 = sbr.rel (%p139) target = $region20
      $region19: #{tpu_custom_call.1} parent=5 // pred_region
        // Predicated region
        $region21: #{tpu_custom_call.1} parent=19 // pred_check
          %p142 = pneg %p75
        $region22: #{tpu_custom_call.1} parent=19 // pred_check_branch
          %144 = sbr.rel (%p142) target = $region24
        $region23: #{tpu_custom_call.1} parent=19 // pred_region
          %s145 = sand.u32 %s65, 1
          %s146 = scalar_lea.sflag [#allocation6], %s145
          %s147 = sand.u32 %s65, 1
          %s148 = smul.addr %s147, 256
          %s149 = scalar_lea.vmem [#allocation5], %s148
          %s150 = smul.u32 16, %s22
          %s151 = smul.u32 2, %s23
          %s153 = ssub.s32 4096, 4096
          %154 = vsyncadd %s146, %s153
          %s155 = smul.addr %s150, 2
          %s156 = sadd.s32 %s151, %s155
          %s157 = smul.addr %s156, 128
          %s158 = scalar_lea.hbm %s1, %s157
          %s159 = sshll.u32 %s149, 4
          %s160 = int_to_ptr.vmem [resolvable:$true] %s159
          %165 = dma.hbm_to_vmem [thread:$0]  %s158, 4096, %s160, %s146, 256, 256, 16
        $region24: #{tpu_custom_call.1} parent=19 // pred_fallthru
          _
      $region20: #{tpu_custom_call.1} parent=5 // pred_fallthru
        _
      %p166 = scmp.le.s32.totalorder 1, %s15
      %p167 = scmp.lt.s32.totalorder %s15, 3
      %p168 = pnand %p166, %p167
      %p169 = pneg %p168
      // Predicated region
      $region25: #{tpu_custom_call.1} parent=5 // pred_check
        _
      $region26: #{tpu_custom_call.1} parent=5 // pred_check_branch
        %171 = sbr.rel (%p168) target = $region28
      $region27: #{tpu_custom_call.1} parent=5 // pred_region
        %s172 = ssub.s32 %s15, 1
        // Predicated region
        $region29: #{tpu_custom_call.1} parent=27 // pred_check
          %p173 = pneg %p53
        $region30: #{tpu_custom_call.1} parent=27 // pred_check_branch
          %175 = sbr.rel (%p173) target = $region32
        $region31: #{tpu_custom_call.1} parent=27 // pred_region
          %176 = dma.done [#allocation3], 4096
        $region32: #{tpu_custom_call.1} parent=27 // pred_fallthru
          _
        %s177 = sand.u32 %s68, 1
        %s178 = scalar_lea.sflag [#allocation6], %s177
        %s179 = sand.u32 %s68, 1
        %s180 = smul.addr %s179, 256
        %s181 = scalar_lea.vmem [#allocation5], %s180
        // Predicated region
        $region33: #{tpu_custom_call.1} parent=27 // pred_check
          %p182 = pneg %p81
        $region34: #{tpu_custom_call.1} parent=27 // pred_check_branch
          %184 = sbr.rel (%p182) target = $region36
        $region35: #{tpu_custom_call.1} parent=27 // pred_region
          %185 = dma.done %s178, 4096
        $region36: #{tpu_custom_call.1} parent=27 // pred_fallthru
          _
        %p186 = pneg %p53
        %p187 = pneg %p50
        %s188 = sand.u32 %s68, 1
        %s189 = scalar_lea.sflag [#allocation6], %s188
        %s190 = sand.u32 %s68, 1
        %s191 = smul.addr %s190, 256
        %s192 = scalar_lea.vmem [#allocation5], %s191
        %p193 = pneg %p81
        %p194 = pneg %p78
        %p195 = pneg %p107
        %p196 = pneg %p104
        %s197 = sand.u32 %s94, 1
        %s198 = scalar_lea.sflag [#allocation4], %s197
        %s199 = sand.u32 %s94, 1
        %s200 = smul.addr %s199, 128
        %s201 = scalar_lea.vmem [#allocation7], %s200
        %s202 = smul.u32 32, %s25
        %s203 = smul.u32 16, %s24
        %s204 = smul.u32 2, %s25
        %s205 = smul.u32 16, %s24
        %p206 = scmp.eq.s32.totalorder %s25, 0
        // Predicated region
        $region37: #{tpu_custom_call.1} parent=27 // pred_check
          %p207 = pneg %p206
        $region38: #{tpu_custom_call.1} parent=27 // pred_check_branch
          %209 = sbr.rel (%p207) target = $region40
        $region39: #{tpu_custom_call.1} parent=27 // pred_region
          %210 = vst [vmem:[%s201] sm:$0xff] 0.0
          %211 = vst [vmem:[%s201 + $0x8] sm:$0xff] 0.0
          %212 = vst [vmem:[%s201 + $0x10] sm:$0xff] 0.0
          %213 = vst [vmem:[%s201 + $0x18] sm:$0xff] 0.0
          %214 = vst [vmem:[%s201 + $0x20] sm:$0xff] 0.0
          %215 = vst [vmem:[%s201 + $0x28] sm:$0xff] 0.0
          %216 = vst [vmem:[%s201 + $0x30] sm:$0xff] 0.0
          %217 = vst [vmem:[%s201 + $0x38] sm:$0xff] 0.0
          %218 = vst [vmem:[%s201 + $0x40] sm:$0xff] 0.0
          %219 = vst [vmem:[%s201 + $0x48] sm:$0xff] 0.0
          %220 = vst [vmem:[%s201 + $0x50] sm:$0xff] 0.0
          %221 = vst [vmem:[%s201 + $0x58] sm:$0xff] 0.0
          %222 = vst [vmem:[%s201 + $0x60] sm:$0xff] 0.0
          %223 = vst [vmem:[%s201 + $0x68] sm:$0xff] 0.0
          %224 = vst [vmem:[%s201 + $0x70] sm:$0xff] 0.0
          %225 = vst [vmem:[%s201 + $0x78] sm:$0xff] 0.0
        $region40: #{tpu_custom_call.1} parent=27 // pred_fallthru
          _
        %v226 = vlaneseq
        %v227 = vand.u32 %v226, 127
        %v228 = vld [vmem:[#allocation2] sm:$0xff]
        %v229 = vld [vmem:[#allocation2 + $0x8] sm:$0xff]
        %v230 = vld [vmem:[#allocation2 + $0x10] sm:$0xff]
        %v231 = vld [vmem:[#allocation2 + $0x18] sm:$0xff]
        %v232 = vld [vmem:[#allocation2 + $0x20] sm:$0xff]
        %v233 = vld [vmem:[#allocation2 + $0x28] sm:$0xff]
        %v234 = vld [vmem:[#allocation2 + $0x30] sm:$0xff]
        %v235 = vld [vmem:[#allocation2 + $0x38] sm:$0xff]
        %v236 = vld [vmem:[#allocation2 + $0x40] sm:$0xff]
        %v237 = vld [vmem:[#allocation2 + $0x48] sm:$0xff]
        %v238 = vld [vmem:[#allocation2 + $0x50] sm:$0xff]
        %v239 = vld [vmem:[#allocation2 + $0x58] sm:$0xff]
        %v240 = vld [vmem:[#allocation2 + $0x60] sm:$0xff]
        %v241 = vld [vmem:[#allocation2 + $0x68] sm:$0xff]
        %v242 = vld [vmem:[#allocation2 + $0x70] sm:$0xff]
        %v243 = vld [vmem:[#allocation2 + $0x78] sm:$0xff]
        %v244 = vld [vmem:[#allocation2 + $0x80] sm:$0xff]
        %v245 = vld [vmem:[#allocation2 + $0x88] sm:$0xff]
        %v246 = vld [vmem:[#allocation2 + $0x90] sm:$0xff]
        %v247 = vld [vmem:[#allocation2 + $0x98] sm:$0xff]
        %v248 = vld [vmem:[#allocation2 + $0xa0] sm:$0xff]
        %v249 = vld [vmem:[#allocation2 + $0xa8] sm:$0xff]
        %v250 = vld [vmem:[#allocation2 + $0xb0] sm:$0xff]
        %v251 = vld [vmem:[#allocation2 + $0xb8] sm:$0xff]
        %v252 = vld [vmem:[#allocation2 + $0xc0] sm:$0xff]
        %v253 = vld [vmem:[#allocation2 + $0xc8] sm:$0xff]
        %v254 = vld [vmem:[#allocation2 + $0xd0] sm:$0xff]
        %v255 = vld [vmem:[#allocation2 + $0xd8] sm:$0xff]
        %v256 = vld [vmem:[#allocation2 + $0xe0] sm:$0xff]
        %v257 = vld [vmem:[#allocation2 + $0xe8] sm:$0xff]
        %v258 = vld [vmem:[#allocation2 + $0xf0] sm:$0xff]
        %v259 = vld [vmem:[#allocation2 + $0xf8] sm:$0xff]
        %260 = vset.pattern.permute.xlu0 0
        %261 = vperm.xlu0 %260, %v228
        %v262 = vpop.permute.xlu0 %261
        %263 = vset.pattern.permute.xlu0 0
        %264 = vperm.xlu0 %263, %v229
        %v265 = vpop.permute.xlu0 %264
        %266 = vset.pattern.permute.xlu0 0
        %267 = vperm.xlu0 %266, %v230
        %v268 = vpop.permute.xlu0 %267
        %269 = vset.pattern.permute.xlu0 0
        %270 = vperm.xlu0 %269, %v231
        %v271 = vpop.permute.xlu0 %270
        %272 = vset.pattern.permute.xlu0 0
        %273 = vperm.xlu0 %272, %v232
        %v274 = vpop.permute.xlu0 %273
        %275 = vset.pattern.permute.xlu0 0
        %276 = vperm.xlu0 %275, %v233
        %v277 = vpop.permute.xlu0 %276
        %278 = vset.pattern.permute.xlu0 0
        %279 = vperm.xlu0 %278, %v234
        %v280 = vpop.permute.xlu0 %279
        %281 = vset.pattern.permute.xlu0 0
        %282 = vperm.xlu0 %281, %v235
        %v283 = vpop.permute.xlu0 %282
        %284 = vset.pattern.permute.xlu0 0
        %285 = vperm.xlu0 %284, %v236
        %v286 = vpop.permute.xlu0 %285
        %287 = vset.pattern.permute.xlu0 0
        %288 = vperm.xlu0 %287, %v237
        %v289 = vpop.permute.xlu0 %288
        %290 = vset.pattern.permute.xlu0 0
        %291 = vperm.xlu0 %290, %v238
        %v292 = vpop.permute.xlu0 %291
        %293 = vset.pattern.permute.xlu0 0
        %294 = vperm.xlu0 %293, %v239
        %v295 = vpop.permute.xlu0 %294
        %296 = vset.pattern.permute.xlu0 0
        %297 = vperm.xlu0 %296, %v240
        %v298 = vpop.permute.xlu0 %297
        %299 = vset.pattern.permute.xlu0 0
        %300 = vperm.xlu0 %299, %v241
        %v301 = vpop.permute.xlu0 %300
        %302 = vset.pattern.permute.xlu0 0
        %303 = vperm.xlu0 %302, %v242
        %v304 = vpop.permute.xlu0 %303
        %305 = vset.pattern.permute.xlu0 0
        %306 = vperm.xlu0 %305, %v243
        %v307 = vpop.permute.xlu0 %306
        %308 = vset.pattern.permute.xlu0 0
        %309 = vperm.xlu0 %308, %v244
        %v310 = vpop.permute.xlu0 %309
        %311 = vset.pattern.permute.xlu0 0
        %312 = vperm.xlu0 %311, %v245
        %v313 = vpop.permute.xlu0 %312
        %314 = vset.pattern.permute.xlu0 0
        %315 = vperm.xlu0 %314, %v246
        %v316 = vpop.permute.xlu0 %315
        %317 = vset.pattern.permute.xlu0 0
        %318 = vperm.xlu0 %317, %v247
        %v319 = vpop.permute.xlu0 %318
        %320 = vset.pattern.permute.xlu0 0
        %321 = vperm.xlu0 %320, %v248
        %v322 = vpop.permute.xlu0 %321
        %323 = vset.pattern.permute.xlu0 0
        %324 = vperm.xlu0 %323, %v249
        %v325 = vpop.permute.xlu0 %324
        %326 = vset.pattern.permute.xlu0 0
        %327 = vperm.xlu0 %326, %v250
        %v328 = vpop.permute.xlu0 %327
        %329 = vset.pattern.permute.xlu0 0
        %330 = vperm.xlu0 %329, %v251
        %v331 = vpop.permute.xlu0 %330
        %332 = vset.pattern.permute.xlu0 0
        %333 = vperm.xlu0 %332, %v252
        %v334 = vpop.permute.xlu0 %333
        %335 = vset.pattern.permute.xlu0 0
        %336 = vperm.xlu0 %335, %v253
        %v337 = vpop.permute.xlu0 %336
        %338 = vset.pattern.permute.xlu0 0
        %339 = vperm.xlu0 %338, %v254
        %v340 = vpop.permute.xlu0 %339
        %341 = vset.pattern.permute.xlu0 0
        %342 = vperm.xlu0 %341, %v255
        %v343 = vpop.permute.xlu0 %342
        %344 = vset.pattern.permute.xlu0 0
        %345 = vperm.xlu0 %344, %v256
        %v346 = vpop.permute.xlu0 %345
        %347 = vset.pattern.permute.xlu0 0
        %348 = vperm.xlu0 %347, %v257
        %v349 = vpop.permute.xlu0 %348
        %350 = vset.pattern.permute.xlu0 0
        %351 = vperm.xlu0 %350, %v258
        %v352 = vpop.permute.xlu0 %351
        %353 = vset.pattern.permute.xlu0 0
        %354 = vperm.xlu0 %353, %v259
        %v355 = vpop.permute.xlu0 %354
        %vm356 = vcmp.eq.s32.totalorder %v262, %v227
        %vm357 = vcmp.eq.s32.totalorder %v265, %v227
        %vm358 = vcmp.eq.s32.totalorder %v268, %v227
        %vm359 = vcmp.eq.s32.totalorder %v271, %v227
        %vm360 = vcmp.eq.s32.totalorder %v274, %v227
        %vm361 = vcmp.eq.s32.totalorder %v277, %v227
        %vm362 = vcmp.eq.s32.totalorder %v280, %v227
        %vm363 = vcmp.eq.s32.totalorder %v283, %v227
        %vm364 = vcmp.eq.s32.totalorder %v286, %v227
        %vm365 = vcmp.eq.s32.totalorder %v289, %v227
        %vm366 = vcmp.eq.s32.totalorder %v292, %v227
        %vm367 = vcmp.eq.s32.totalorder %v295, %v227
        %vm368 = vcmp.eq.s32.totalorder %v298, %v227
        %vm369 = vcmp.eq.s32.totalorder %v301, %v227
        %vm370 = vcmp.eq.s32.totalorder %v304, %v227
        %vm371 = vcmp.eq.s32.totalorder %v307, %v227
        %vm372 = vcmp.eq.s32.totalorder %v310, %v227
        %vm373 = vcmp.eq.s32.totalorder %v313, %v227
        %vm374 = vcmp.eq.s32.totalorder %v316, %v227
        %vm375 = vcmp.eq.s32.totalorder %v319, %v227
        %vm376 = vcmp.eq.s32.totalorder %v322, %v227
        %vm377 = vcmp.eq.s32.totalorder %v325, %v227
        %vm378 = vcmp.eq.s32.totalorder %v328, %v227
        %vm379 = vcmp.eq.s32.totalorder %v331, %v227
        %vm380 = vcmp.eq.s32.totalorder %v334, %v227
        %vm381 = vcmp.eq.s32.totalorder %v337, %v227
        %vm382 = vcmp.eq.s32.totalorder %v340, %v227
        %vm383 = vcmp.eq.s32.totalorder %v343, %v227
        %vm384 = vcmp.eq.s32.totalorder %v346, %v227
        %vm385 = vcmp.eq.s32.totalorder %v349, %v227
        %vm386 = vcmp.eq.s32.totalorder %v352, %v227
        %vm387 = vcmp.eq.s32.totalorder %v355, %v227
        %v388 = vsel %vm356, 1, 0
        %v389 = vsel %vm357, 1, 0
        %v390 = vsel %vm358, 1, 0
        %v391 = vsel %vm359, 1, 0
        %v392 = vsel %vm360, 1, 0
        %v393 = vsel %vm361, 1, 0
        %v394 = vsel %vm362, 1, 0
        %v395 = vsel %vm363, 1, 0
        %v396 = vsel %vm364, 1, 0
        %v397 = vsel %vm365, 1, 0
        %v398 = vsel %vm366, 1, 0
        %v399 = vsel %vm367, 1, 0
        %v400 = vsel %vm368, 1, 0
        %v401 = vsel %vm369, 1, 0
        %v402 = vsel %vm370, 1, 0
        %v403 = vsel %vm371, 1, 0
        %v404 = vsel %vm372, 1, 0
        %v405 = vsel %vm373, 1, 0
        %v406 = vsel %vm374, 1, 0
        %v407 = vsel %vm375, 1, 0
        %v408 = vsel %vm376, 1, 0
        %v409 = vsel %vm377, 1, 0
        %v410 = vsel %vm378, 1, 0
        %v411 = vsel %vm379, 1, 0
        %v412 = vsel %vm380, 1, 0
        %v413 = vsel %vm381, 1, 0
        %v414 = vsel %vm382, 1, 0
        %v415 = vsel %vm383, 1, 0
        %v416 = vsel %vm384, 1, 0
        %v417 = vsel %vm385, 1, 0
        %v418 = vsel %vm386, 1, 0
        %v419 = vsel %vm387, 1, 0
        %v420 = vcvt.s32.f32 %v388
        %v421 = vcvt.s32.f32 %v389
        %v422 = vcvt.s32.f32 %v390
        %v423 = vcvt.s32.f32 %v391
        %v424 = vcvt.s32.f32 %v392
        %v425 = vcvt.s32.f32 %v393
        %v426 = vcvt.s32.f32 %v394
        %v427 = vcvt.s32.f32 %v395
        %v428 = vcvt.s32.f32 %v396
        %v429 = vcvt.s32.f32 %v397
        %v430 = vcvt.s32.f32 %v398
        %v431 = vcvt.s32.f32 %v399
        %v432 = vcvt.s32.f32 %v400
        %v433 = vcvt.s32.f32 %v401
        %v434 = vcvt.s32.f32 %v402
        %v435 = vcvt.s32.f32 %v403
        %v436 = vcvt.s32.f32 %v404
        %v437 = vcvt.s32.f32 %v405
        %v438 = vcvt.s32.f32 %v406
        %v439 = vcvt.s32.f32 %v407
        %v440 = vcvt.s32.f32 %v408
        %v441 = vcvt.s32.f32 %v409
        %v442 = vcvt.s32.f32 %v410
        %v443 = vcvt.s32.f32 %v411
        %v444 = vcvt.s32.f32 %v412
        %v445 = vcvt.s32.f32 %v413
        %v446 = vcvt.s32.f32 %v414
        %v447 = vcvt.s32.f32 %v415
        %v448 = vcvt.s32.f32 %v416
        %v449 = vcvt.s32.f32 %v417
        %v450 = vcvt.s32.f32 %v418
        %v451 = vcvt.s32.f32 %v419
        %v452 = vld [vmem:[%s201] sm:$0xff]
        %v453 = vld [vmem:[%s201 + $0x8] sm:$0xff]
        %v454 = vld [vmem:[%s201 + $0x10] sm:$0xff]
        %v455 = vld [vmem:[%s201 + $0x18] sm:$0xff]
        %v456 = vld [vmem:[%s201 + $0x20] sm:$0xff]
        %v457 = vld [vmem:[%s201 + $0x28] sm:$0xff]
        %v458 = vld [vmem:[%s201 + $0x30] sm:$0xff]
        %v459 = vld [vmem:[%s201 + $0x38] sm:$0xff]
        %v460 = vld [vmem:[%s201 + $0x40] sm:$0xff]
        %v461 = vld [vmem:[%s201 + $0x48] sm:$0xff]
        %v462 = vld [vmem:[%s201 + $0x50] sm:$0xff]
        %v463 = vld [vmem:[%s201 + $0x58] sm:$0xff]
        %v464 = vld [vmem:[%s201 + $0x60] sm:$0xff]
        %v465 = vld [vmem:[%s201 + $0x68] sm:$0xff]
        %v466 = vld [vmem:[%s201 + $0x70] sm:$0xff]
        %v467 = vld [vmem:[%s201 + $0x78] sm:$0xff]
        %v468 = vld [vmem:[%s181] sm:$0xff]
        %v469 = vld [vmem:[%s181 + $0x8] sm:$0xff]
        %v470 = vld [vmem:[%s181 + $0x10] sm:$0xff]
        %v471 = vld [vmem:[%s181 + $0x18] sm:$0xff]
        %v472 = vld [vmem:[%s181 + $0x20] sm:$0xff]
        %v473 = vld [vmem:[%s181 + $0x28] sm:$0xff]
        %v474 = vld [vmem:[%s181 + $0x30] sm:$0xff]
        %v475 = vld [vmem:[%s181 + $0x38] sm:$0xff]
        %v476 = vld [vmem:[%s181 + $0x40] sm:$0xff]
        %v477 = vld [vmem:[%s181 + $0x48] sm:$0xff]
        %v478 = vld [vmem:[%s181 + $0x50] sm:$0xff]
        %v479 = vld [vmem:[%s181 + $0x58] sm:$0xff]
        %v480 = vld [vmem:[%s181 + $0x60] sm:$0xff]
        %v481 = vld [vmem:[%s181 + $0x68] sm:$0xff]
        %v482 = vld [vmem:[%s181 + $0x70] sm:$0xff]
        %v483 = vld [vmem:[%s181 + $0x78] sm:$0xff]
        %v484 = vld [vmem:[%s181 + $0x80] sm:$0xff]
        %v485 = vld [vmem:[%s181 + $0x88] sm:$0xff]
        %v486 = vld [vmem:[%s181 + $0x90] sm:$0xff]
        %v487 = vld [vmem:[%s181 + $0x98] sm:$0xff]
        %v488 = vld [vmem:[%s181 + $0xa0] sm:$0xff]
        %v489 = vld [vmem:[%s181 + $0xa8] sm:$0xff]
        %v490 = vld [vmem:[%s181 + $0xb0] sm:$0xff]
        %v491 = vld [vmem:[%s181 + $0xb8] sm:$0xff]
        %v492 = vld [vmem:[%s181 + $0xc0] sm:$0xff]
        %v493 = vld [vmem:[%s181 + $0xc8] sm:$0xff]
        %v494 = vld [vmem:[%s181 + $0xd0] sm:$0xff]
        %v495 = vld [vmem:[%s181 + $0xd8] sm:$0xff]
        %v496 = vld [vmem:[%s181 + $0xe0] sm:$0xff]
        %v497 = vld [vmem:[%s181 + $0xe8] sm:$0xff]
        %v498 = vld [vmem:[%s181 + $0xf0] sm:$0xff]
        %v499 = vld [vmem:[%s181 + $0xf8] sm:$0xff]
        %500 = vmatprep.subr.mxu0 0.0
        %501 = vmatpush1.msra.mxu0 %v420
        %502 = vmatprep.subr.mxu0 0.0
        %503 = vmatpush1.msra.mxu0 %v421
        %504 = vmatprep.subr.mxu0 0.0
        %505 = vmatpush1.msra.mxu0 %v422
        %506 = vmatprep.subr.mxu0 0.0
        %507 = vmatpush1.msra.mxu0 %v423
        %508 = vmatprep.subr.mxu0 0.0
        %509 = vmatpush1.msra.mxu0 %v424
        %510 = vmatprep.subr.mxu0 0.0
        %511 = vmatpush1.msra.mxu0 %v425
        %512 = vmatprep.subr.mxu0 0.0
        %513 = vmatpush1.msra.mxu0 %v426
        %514 = vmatprep.subr.mxu0 0.0
        %515 = vmatpush1.msra.mxu0 %v427
        %516 = vmatprep.subr.mxu0 0.0
        %517 = vmatpush1.msra.mxu0 %v428
        %518 = vmatprep.subr.mxu0 0.0
        %519 = vmatpush1.msra.mxu0 %v429
        %520 = vmatprep.subr.mxu0 0.0
        %521 = vmatpush1.msra.mxu0 %v430
        %522 = vmatprep.subr.mxu0 0.0
        %523 = vmatpush1.msra.mxu0 %v431
        %524 = vmatprep.subr.mxu0 0.0
        %525 = vmatpush1.msra.mxu0 %v432
        %526 = vmatprep.subr.mxu0 0.0
        %527 = vmatpush1.msra.mxu0 %v433
        %528 = vmatprep.subr.mxu0 0.0
        %529 = vmatpush1.msra.mxu0 %v434
        %530 = vmatprep.subr.mxu0 0.0
        %531 = vmatpush1.msra.mxu0 %v435
        %532 = vmatprep.subr.mxu0 0.0
        %533 = vmatpush1.msra.mxu0 %v436
        %534 = vmatprep.subr.mxu0 0.0
        %535 = vmatpush1.msra.mxu0 %v437
        %536 = vmatprep.subr.mxu0 0.0
        %537 = vmatpush1.msra.mxu0 %v438
        %538 = vmatprep.subr.mxu0 0.0
        %539 = vmatpush1.msra.mxu0 %v439
        %540 = vmatprep.subr.mxu0 0.0
        %541 = vmatpush1.msra.mxu0 %v440
        %542 = vmatprep.subr.mxu0 0.0
        %543 = vmatpush1.msra.mxu0 %v441
        %544 = vmatprep.subr.mxu0 0.0
        %545 = vmatpush1.msra.mxu0 %v442
        %546 = vmatprep.subr.mxu0 0.0
        %547 = vmatpush1.msra.mxu0 %v443
        %548 = vmatprep.subr.mxu0 0.0
        %549 = vmatpush1.msra.mxu0 %v444
        %550 = vmatprep.subr.mxu0 0.0
        %551 = vmatpush1.msra.mxu0 %v445
        %552 = vmatprep.subr.mxu0 0.0
        %553 = vmatpush1.msra.mxu0 %v446
        %554 = vmatprep.subr.mxu0 0.0
        %555 = vmatpush1.msra.mxu0 %v447
        %556 = vmatprep.subr.mxu0 0.0
        %557 = vmatpush1.msra.mxu0 %v448
        %558 = vmatprep.subr.mxu0 0.0
        %559 = vmatpush1.msra.mxu0 %v449
        %560 = vmatprep.subr.mxu0 0.0
        %561 = vmatpush1.msra.mxu0 %v450
        %562 = vmatprep.subr.mxu0 0.0
        %563 = vmatpush1.msra.mxu0 %v451
        %564 = vmatprep.mubr.f32.mxu0 %v469
        %565 = vmatmul.mubr.f32.gmra.mrb[0].mxu0 %v468
        %v566 = vpop.f32.mrb[0].mxu0
        %v567 = vadd.f32 0.0, %v566
        %v568 = vpop.f32.mrb[0].mxu0
        %569 = vmatprep.mubr.f32.mxu0 %v471
        %570 = vmatmul.mubr.f32.gmra.mrb[0].mxu0 %v470
        %v571 = vpop.f32.mrb[0].mxu0
        %v572 = vadd.f32 0.0, %v571
        %v573 = vpop.f32.mrb[0].mxu0
        %574 = vmatprep.mubr.f32.mxu0 %v473
        %575 = vmatmul.mubr.f32.gmra.mrb[0].mxu0 %v472
        %v576 = vpop.f32.mrb[0].mxu0
        %v577 = vadd.f32 0.0, %v576
        %v578 = vpop.f32.mrb[0].mxu0
        %579 = vmatprep.mubr.f32.mxu0 %v475
        %580 = vmatmul.mubr.f32.gmra.mrb[0].mxu0 %v474
        %v581 = vpop.f32.mrb[0].mxu0
        %v582 = vadd.f32 0.0, %v581
        %v583 = vpop.f32.mrb[0].mxu0
        %584 = vmatprep.mubr.f32.mxu0 %v477
        %585 = vmatmul.mubr.f32.gmra.mrb[0].mxu0 %v476
        %v586 = vpop.f32.mrb[0].mxu0
        %v587 = vadd.f32 0.0, %v586
        %v588 = vpop.f32.mrb[0].mxu0
        %589 = vmatprep.mubr.f32.mxu0 %v479
        %590 = vmatmul.mubr.f32.gmra.mrb[0].mxu0 %v478
        %v591 = vpop.f32.mrb[0].mxu0
        %v592 = vadd.f32 0.0, %v591
        %v593 = vpop.f32.mrb[0].mxu0
        %594 = vmatprep.mubr.f32.mxu0 %v481
        %595 = vmatmul.mubr.f32.gmra.mrb[0].mxu0 %v480
        %v596 = vpop.f32.mrb[0].mxu0
        %v597 = vadd.f32 0.0, %v596
        %v598 = vpop.f32.mrb[0].mxu0
        %599 = vmatprep.mubr.f32.mxu0 %v483
        %600 = vmatmul.mubr.f32.gmra.mrb[0].mxu0 %v482
        %v601 = vpop.f32.mrb[0].mxu0
        %v602 = vadd.f32 0.0, %v601
        %v603 = vpop.f32.mrb[0].mxu0
        %604 = vmatprep.mubr.f32.mxu0 %v485
        %605 = vmatmul.mubr.f32.gmra.mrb[0].mxu0 %v484
        %v606 = vpop.f32.mrb[0].mxu0
        %v607 = vadd.f32 0.0, %v606
        %v608 = vpop.f32.mrb[0].mxu0
        %609 = vmatprep.mubr.f32.mxu0 %v487
        %610 = vmatmul.mubr.f32.gmra.mrb[0].mxu0 %v486
        %v611 = vpop.f32.mrb[0].mxu0
        %v612 = vadd.f32 0.0, %v611
        %v613 = vpop.f32.mrb[0].mxu0
        %614 = vmatprep.mubr.f32.mxu0 %v489
        %615 = vmatmul.mubr.f32.gmra.mrb[0].mxu0 %v488
        %v616 = vpop.f32.mrb[0].mxu0
        %v617 = vadd.f32 0.0, %v616
        %v618 = vpop.f32.mrb[0].mxu0
        %619 = vmatprep.mubr.f32.mxu0 %v491
        %620 = vmatmul.mubr.f32.gmra.mrb[0].mxu0 %v490
        %v621 = vpop.f32.mrb[0].mxu0
        %v622 = vadd.f32 0.0, %v621
        %v623 = vpop.f32.mrb[0].mxu0
        %624 = vmatprep.mubr.f32.mxu0 %v493
        %625 = vmatmul.mubr.f32.gmra.mrb[0].mxu0 %v492
        %v626 = vpop.f32.mrb[0].mxu0
        %v627 = vadd.f32 0.0, %v626
        %v628 = vpop.f32.mrb[0].mxu0
        %629 = vmatprep.mubr.f32.mxu0 %v495
        %630 = vmatmul.mubr.f32.gmra.mrb[0].mxu0 %v494
        %v631 = vpop.f32.mrb[0].mxu0
        %v632 = vadd.f32 0.0, %v631
        %v633 = vpop.f32.mrb[0].mxu0
        %634 = vmatprep.mubr.f32.mxu0 %v497
        %635 = vmatmul.mubr.f32.gmra.mrb[0].mxu0 %v496
        %v636 = vpop.f32.mrb[0].mxu0
        %v637 = vadd.f32 0.0, %v636
        %v638 = vpop.f32.mrb[0].mxu0
        %639 = vmatprep.mubr.f32.mxu0 %v499
        %640 = vmatmul.mubr.f32.gmra.mrb[0].mxu0 %v498
        %v641 = vpop.f32.mrb[0].mxu0
        %v642 = vadd.f32 0.0, %v641
        %v643 = vpop.f32.mrb[0].mxu0
        %644 = vdwg.mxu0
        %v645 = vadd.f32 %v452, %v567
        %v646 = vadd.f32 %v453, %v572
        %v647 = vadd.f32 %v454, %v577
        %v648 = vadd.f32 %v455, %v582
        %v649 = vadd.f32 %v456, %v587
        %v650 = vadd.f32 %v457, %v592
        %v651 = vadd.f32 %v458, %v597
        %v652 = vadd.f32 %v459, %v602
        %v653 = vadd.f32 %v460, %v607
        %v654 = vadd.f32 %v461, %v612
        %v655 = vadd.f32 %v462, %v617
        %v656 = vadd.f32 %v463, %v622
        %v657 = vadd.f32 %v464, %v627
        %v658 = vadd.f32 %v465, %v632
        %v659 = vadd.f32 %v466, %v637
        %v660 = vadd.f32 %v467, %v642
        %661 = vst [vmem:[%s201] sm:$0xff] %v645
        %662 = vst [vmem:[%s201 + $0x8] sm:$0xff] %v646
        %663 = vst [vmem:[%s201 + $0x10] sm:$0xff] %v647
        %664 = vst [vmem:[%s201 + $0x18] sm:$0xff] %v648
        %665 = vst [vmem:[%s201 + $0x20] sm:$0xff] %v649
        %666 = vst [vmem:[%s201 + $0x28] sm:$0xff] %v650
        %667 = vst [vmem:[%s201 + $0x30] sm:$0xff] %v651
        %668 = vst [vmem:[%s201 + $0x38] sm:$0xff] %v652
        %669 = vst [vmem:[%s201 + $0x40] sm:$0xff] %v653
        %670 = vst [vmem:[%s201 + $0x48] sm:$0xff] %v654
        %671 = vst [vmem:[%s201 + $0x50] sm:$0xff] %v655
        %672 = vst [vmem:[%s201 + $0x58] sm:$0xff] %v656
        %673 = vst [vmem:[%s201 + $0x60] sm:$0xff] %v657
        %674 = vst [vmem:[%s201 + $0x68] sm:$0xff] %v658
        %675 = vst [vmem:[%s201 + $0x70] sm:$0xff] %v659
        %676 = vst [vmem:[%s201 + $0x78] sm:$0xff] %v660
        %s677 = sand.u32 %s94, 1
        %s678 = scalar_lea.sflag [#allocation4], %s677
        %s679 = sand.u32 %s94, 1
        %s680 = smul.addr %s679, 128
        %s681 = scalar_lea.vmem [#allocation7], %s680
        // Predicated region
        $region41: #{tpu_custom_call.1} parent=27 // pred_check
          %p682 = pneg %p104
        $region42: #{tpu_custom_call.1} parent=27 // pred_check_branch
          %684 = sbr.rel (%p682) target = $region44
        $region43: #{tpu_custom_call.1} parent=27 // pred_region
          %s685 = smul.u32 16, %s24
          %s687 = ssub.s32 2048, 2048
          %688 = vsyncadd %s678, %s687
          %s689 = smul.addr %s685, 128
          %s690 = scalar_lea.hbm %s2, %s689
          %s691 = sshll.u32 %s681, 4
          %s692 = int_to_ptr.vmem [resolvable:$true] %s691
          %697 = dma.vmem_to_hbm [thread:$0]  %s692, 2048, %s690, %s678, 128, 128, 8
        $region44: #{tpu_custom_call.1} parent=27 // pred_fallthru
          _
      $region28: #{tpu_custom_call.1} parent=5 // pred_fallthru
        _
      %p698 = scmp.le.s32.totalorder 2, %s15
      // Predicated region
      $region45: #{tpu_custom_call.1} parent=5 // pred_check
        %p699 = pneg %p698
      $region46: #{tpu_custom_call.1} parent=5 // pred_check_branch
        %701 = sbr.rel (%p699) target = $region48
      $region47: #{tpu_custom_call.1} parent=5 // pred_region
        %s702 = ssub.s32 %s15, 2
        // Predicated region
        $region49: #{tpu_custom_call.1} parent=47 // pred_check
          %p703 = pneg %p110
        $region50: #{tpu_custom_call.1} parent=47 // pred_check_branch
          %705 = sbr.rel (%p703) target = $region52
        $region51: #{tpu_custom_call.1} parent=47 // pred_region
          %s706 = sand.u32 %s95, 1
          %s707 = scalar_lea.sflag [#allocation4], %s706
          %s708 = sand.u32 %s95, 1
          %s709 = smul.addr %s708, 128
          %s710 = scalar_lea.vmem [#allocation7], %s709
          %711 = dma.done %s707, 2048
        $region52: #{tpu_custom_call.1} parent=47 // pred_fallthru
          _
      $region48: #{tpu_custom_call.1} parent=5 // pred_fallthru
        _
    $region6: #{tpu_custom_call.1} parent=1 // loop_footer
      %s19 = sadd.s32 1, %s15
    $region7: #{tpu_custom_call.1} parent=1 // loop_footer_branch
      %14 = sbr.rel target = $region3
    $region8: #{tpu_custom_call.1} parent=1 // loop_exit
      _
    %712 = vsyncpa [#allocation3], 1
    %s713 = scalar_lea.sflag [#allocation3], 1
    %714 = vsyncpa %s713, 1
    %715 = vsyncpa [#allocation6], 1
    %s716 = scalar_lea.sflag [#allocation6], 1
    %717 = vsyncpa %s716, 1
    %718 = vsyncpa [#allocation4], 1
    %s719 = scalar_lea.sflag [#allocation4], 1
    %720 = vsyncpa %s719, 1

</llo_original>
